<compile_context>
chip_gen: v7x
topology: tpu7x:2x2x1
jax: 0.10.0
libtpu: 0.0.40
codegen_flags: <defaults>
</compile_context>

<pallas_src>
import functools

import jax
import jax.numpy as jnp
from jax import lax
from jax.experimental import pallas as pl
from jax.experimental.pallas import tpu as pltpu

DIM = 384          # dim_inet
DIM_FNET = 128     # dim_fnet
CIN = 5            # event-voxel channels (input_dim=5)
PATCH_SIZE = 3

_PATCHIFY_STATIC_UNROLL_MAX = 16   # beyond this, use fori_loop in the kernel


def _round_up(x, m):
    return ((x + m - 1) // m) * m


def _cdiv(a, b):
    return -(-a // b)


# --------------------------------------------------------------------------
# Pallas kernel 1: fused conv-as-matmul
#   main slab : (rows, 512) = [fnet(ReLU, /4 folded) | inet(/4 folded)]  bf16
#   scorer    : (rows, 1) raw logits (bias + sigmoid applied in wrapper) f32
# --------------------------------------------------------------------------
def _fused_matmul_kernel(a_ref, w_ref, ws_ref, bias_ref, o_ref, s_ref, *, n_relu):
    a = a_ref[...]
    acc = jnp.dot(a, w_ref[...], preferred_element_type=jnp.float32)
    acc = acc + bias_ref[...]
    # ReLU only on the first n_relu (fnet) columns; (1, cout) iota broadcast.
    col = lax.broadcasted_iota(jnp.int32, (1, acc.shape[1]), 1)
    acc = jnp.where(col < n_relu, jnp.maximum(acc, 0.0), acc)
    o_ref[...] = acc.astype(o_ref.dtype)
    # Scorer: weight padded to 128 lanes (col 0 is real); keep only column 0.
    sc = jnp.dot(a, ws_ref[...], preferred_element_type=jnp.float32)
    s_ref[...] = sc[:, 0:1]


def conv_fused(cols, w_main, ws_pad, bias_main, *, n_relu, out_dtype,
               tm_max=1024):
    """cols: (rows, K) -> ((rows, Cout) out_dtype, (rows, 1) f32 logits)."""
    rows, K = cols.shape
    cout = w_main.shape[1]
    tm = min(tm_max, _round_up(rows, 8))
    # Guarantee >= 2 grid steps when possible so "parallel" can shard the row
    # tiles across v7x's two TensorCores (costs nothing on v5e/v6e).
    if rows > 8 and _cdiv(rows, tm) < 2:
        tm = _round_up(_cdiv(rows, 2), 8)
    grid = _cdiv(rows, tm)
    return pl.pallas_call(
        functools.partial(_fused_matmul_kernel, n_relu=n_relu),
        out_shape=(jax.ShapeDtypeStruct((rows, cout), out_dtype),
                   jax.ShapeDtypeStruct((rows, 1), jnp.float32)),
        grid_spec=pltpu.PrefetchScalarGridSpec(
            num_scalar_prefetch=0,
            grid=(grid,),
            in_specs=[
                pl.BlockSpec((tm, K), lambda i: (i, 0)),
                pl.BlockSpec((K, cout), lambda i: (0, 0)),
                pl.BlockSpec((K, 128), lambda i: (0, 0)),
                pl.BlockSpec((1, cout), lambda i: (0, 0)),
            ],
            out_specs=(pl.BlockSpec((tm, cout), lambda i: (i, 0)),
                       pl.BlockSpec((tm, 1), lambda i: (i, 0))),
        ),
        compiler_params=pltpu.CompilerParams(
            dimension_semantics=("parallel",)),
    )(cols.astype(jnp.bfloat16), w_main.astype(jnp.bfloat16),
      ws_pad.astype(jnp.bfloat16), bias_main.reshape(1, cout).astype(jnp.float32))


def _im2col_4x4_s4(x_nchw):
    """x: (N, Cin, H, W) -> cols (N*h*w, Cin*16), h, w   (4x4 stride-4 patches)."""
    n, cin, hh, ww = x_nchw.shape
    h, w = hh // 4, ww // 4
    cols = x_nchw.reshape(n, cin, h, 4, w, 4)
    cols = jnp.transpose(cols, (0, 2, 4, 1, 3, 5)).reshape(n * h * w, cin * 16)
    return cols, h, w


# --------------------------------------------------------------------------
# Pallas kernel 2: patchify (altcorr.patchify equivalent, radius > 0)
# Data-dependent gather: per patch, one strided DMA of exactly the (p, p, C)
# patch from HBM (double-buffered). Frames never enter VMEM whole.
# --------------------------------------------------------------------------
def _patchify_kernel(xs_ref, ys_ref, src_hbm, out_ref, band, sem,
                     *, p, num_patches):
    i = pl.program_id(0)

    def start(m, slot):
        cy = ys_ref[i, m]                                  # top-left row (SMEM)
        cx = xs_ref[i, m]                                  # top-left col (SMEM)
        pltpu.make_async_copy(
            src_hbm.at[i, pl.ds(cy, p), pl.ds(cx, p)],     # (p, p, C) patch
            band.at[slot], sem.at[slot]).start()

    def wait(slot):
        pltpu.make_async_copy(
            src_hbm.at[i, pl.ds(0, p), pl.ds(0, p)],       # shape-matching desc
            band.at[slot], sem.at[slot]).wait()

    start(0, 0)

    if num_patches <= _PATCHIFY_STATIC_UNROLL_MAX:
        # Small counts: static unroll keeps everything visible to the scheduler.
        for m in range(num_patches):
            slot = m & 1
            wait(slot)
            if m + 1 < num_patches:
                start(m + 1, 1 - slot)                     # prefetch next patch
            out_ref[0, m] = band[slot]
    else:
        # Large counts: fori_loop bounds live ranges / compile time.
        def body(m, carry):
            slot = m & 1
            wait(slot)

            @pl.when(m + 1 < num_patches)
            def _():
                start(m + 1, 1 - slot)

            out_ref[0, m] = band[slot]
            return carry

        lax.fori_loop(0, num_patches, body, 0)


def patchify(fmap_nhwc, xs, ys, radius):
    """fmap_nhwc: (n, h, w, C); xs/ys: (n, M) int patch-center coordinates.
    Returns (n, M, P, P, C) with P = 2*radius + 1."""
    n, h, w, c = fmap_nhwc.shape
    num_p = xs.shape[1]
    p = 2 * radius + 1
    # Top-left corners, clamped in-bounds (defensive: SCORER-path coords are
    # always in-bounds; TPU DMA reads are not bounds-checked).
    xs0 = jnp.clip(xs.astype(jnp.int32) - radius, 0, w - p)
    ys0 = jnp.clip(ys.astype(jnp.int32) - radius, 0, h - p)
    return pl.pallas_call(
        functools.partial(_patchify_kernel, p=p, num_patches=num_p),
        out_shape=jax.ShapeDtypeStruct((n, num_p, p, p, c), fmap_nhwc.dtype),
        grid_spec=pltpu.PrefetchScalarGridSpec(
            num_scalar_prefetch=2,
            grid=(n,),
            in_specs=[pl.BlockSpec(memory_space=pl.ANY)],   # frame stays in HBM
            out_specs=pl.BlockSpec((1, num_p, p, p, c),
                                   lambda i, xr, yr: (i, 0, 0, 0, 0)),
            scratch_shapes=[
                pltpu.VMEM((2, p, p, c), fmap_nhwc.dtype),  # double-buffered patch
                pltpu.SemaphoreType.DMA((2,)),
            ],
        ),
        compiler_params=pltpu.CompilerParams(
            dimension_semantics=("parallel",)),             # frames independent
    )(xs0, ys0, fmap_nhwc)


# --------------------------------------------------------------------------
# JAX glue: parameters & forward
# --------------------------------------------------------------------------
def init_patchifier_params(key, dim_inet=DIM, dim_fnet=DIM_FNET, cin=CIN):
    def conv_init(k, cout):
        kw, kb = jax.random.split(k)
        fan_in = cin * 16
        w = jax.random.normal(kw, (cout, cin, 4, 4), jnp.float32) / jnp.sqrt(fan_in)
        b = 0.01 * jax.random.normal(kb, (cout,), jnp.float32)
        return w, b

    kf, ki, ks = jax.random.split(key, 3)
    fw, fb = conv_init(kf, dim_fnet)
    iw, ib = conv_init(ki, dim_inet)
    sw, sb = conv_init(ks, 1)
    return {"fnet_w": fw, "fnet_b": fb,
            "inet_w": iw, "inet_b": ib,
            "scorer_w": sw, "scorer_b": sb}


def patchifier_forward(params, images, patches_per_image=8, rng=None,
                       patch_size=PATCH_SIZE, dim_inet=DIM, dim_fnet=DIM_FNET,
                       feat_dtype=jnp.bfloat16, return_channels_last=False):
    """Training-mode SCORER path of Patchifier.forward (disps=None).

    feat_dtype: dtype of fmap/imap/gmap outputs (bf16 halves HBM write traffic;
    pass jnp.float32 if downstream requires full precision)."""
    b, n, c, hh, ww = images.shape
    if b != 1:
        # Reference semantics (scores[0], imap[0], fmap[0]) assume batch == 1.
        raise NotImplementedError("Patchifier SCORER path assumes batch == 1")
    x_flat = images.reshape(b * n, c, hh, ww)

    # ---- fused fnet / inet / scorer conv (one Pallas matmul) ----------------
    # TODO(synk): fnet/inet are full BasicEncoder4Evs residual encoders and
    # Scorer(5) is a small conv net in the reference; each is modeled here as a
    # single 4x4 stride-4 conv (+ReLU for fnet). The post-encoder /4.0 is folded
    # into weights+bias (exact: relu(x)/4 == relu(x/4)).
    wf = (params["fnet_w"] * 0.25).reshape(dim_fnet, -1)
    wi = (params["inet_w"] * 0.25).reshape(dim_inet, -1)
    bfv = params["fnet_b"] * 0.25
    biv = params["inet_b"] * 0.25

    w_main = jnp.concatenate([wf, wi], axis=0).T          # (K, 512) lane-dense
    bias_main = jnp.concatenate([bfv, biv], axis=0)       # (512,)
    ws = params["scorer_w"].reshape(1, -1)                # (1, K)
    ws_pad = jnp.pad(ws, ((0, 127), (0, 0))).T            # (K, 128), col 0 real

    cols, h, w = _im2col_4x4_s4(x_flat.astype(jnp.bfloat16))   # (b*n*h*w, 80)
    out_main, out_score = conv_fused(cols, w_main, ws_pad, bias_main,
                                     n_relu=dim_fnet, out_dtype=feat_dtype)

    fmap_cl = out_main[:, :dim_fnet].reshape(b, n, h, w, dim_fnet)
    imap_cl = out_main[:, dim_fnet:].reshape(b, n, h, w, dim_inet)
    score_logits = out_score.reshape(b, n, h, w) + params["scorer_b"][0]

    if return_channels_last:
        fmap = fmap_cl
    else:
        # TODO(synk): this NCHW relayout is an extra HBM round-trip over the
        # largest tensor; pass return_channels_last=True if consumers accept
        # channels-last (or fuse the relayout into the consumer kernel).
        fmap = jnp.transpose(fmap_cl, (0, 1, 4, 2, 3))     # (b,n,C_f,h,w)

    p = patch_size
    ppi = patches_per_image

    # ---- SCORER training-mode coordinate selection --------------------------
    kx, ky = jax.random.split(rng)
    x = jax.random.randint(kx, (n, 3 * ppi), 0, w - 2, dtype=jnp.int32)
    y = jax.random.randint(ky, (n, 3 * ppi), 0, h - 2, dtype=jnp.int32)

    # radius-0 score lookup: plain advanced indexing. Sort on raw logits —
    # sigmoid is monotonic so the selection is identical; apply sigmoid only
    # to the returned top-k scores.
    frame_idx = jnp.arange(n, dtype=jnp.int32)[:, None]
    sl = score_logits[0][frame_idx, y, x]                  # (n, 3*ppi) logits
    ix = jnp.argsort(sl, axis=1)
    x = x + 1
    y = y + 1
    x = jnp.take_along_axis(x, ix[:, -ppi:], axis=1)
    y = jnp.take_along_axis(y, ix[:, -ppi:], axis=1)
    top_scores = jax.nn.sigmoid(
        jnp.take_along_axis(sl, ix[:, -ppi:], axis=1)).reshape(n, ppi)

    # ---- patch gathers -------------------------------------------------------
    # radius-0 imap gather is a degenerate 1x1 lookup: plain advanced indexing.
    imap_p = imap_cl[0][frame_idx, y, x]                   # (n, ppi, C_i)
    imap_p = imap_p.reshape(b, -1, dim_inet, 1, 1)

    # radius-(p//2) fmap gather: Pallas strided-DMA gather kernel.
    gmap = patchify(fmap_cl[0], x, y, radius=p // 2)       # (n,ppi,p,p,C_f)
    gmap = jnp.transpose(gmap, (0, 1, 4, 2, 3)).reshape(b, -1, dim_fnet, p, p)

    # ---- coordinate-grid patches, computed analytically ----------------------
    # Equivalent to coords_grid_with_index(ones) followed by a radius-p//2
    # patchify of grid[0]; xx/yy channels are x±off / y±off and the disparity
    # channel is 1.0 when disps is None.
    # TODO(synk): if an explicit `disps` tensor is supplied, its values must be
    # gathered from the grid instead of the constant 1.0 channel.
    offs = jnp.arange(-(p // 2), p // 2 + 1, dtype=jnp.float32)
    xg = jnp.broadcast_to(
        x[:, :, None, None].astype(jnp.float32) + offs[None, None, None, :],
        (n, ppi, p, p))
    yg = jnp.broadcast_to(
        y[:, :, None, None].astype(jnp.float32) + offs[None, None, :, None],
        (n, ppi, p, p))
    dg = jnp.ones((n, ppi, p, p), jnp.float32)
    patches = jnp.stack([xg, yg, dg], axis=2).reshape(b, -1, 3, p, p)

    index = jnp.repeat(jnp.arange(n, dtype=jnp.int32), ppi)

    # TODO(synk): GRADIENT / RANDOM selectors, eval-mode PatchSelector and the
    # return_color branch are not reproduced here.
    return fmap, gmap, imap_p, patches, index, top_scores


if __name__ == "__main__":
    key = jax.random.PRNGKey(0)
    kp, ki, kr = jax.random.split(key, 3)

    b, n, c, H, W = 1, 2, 5, 32, 32
    ppi = 8
    images = jax.random.normal(ki, (b, n, c, H, W), jnp.float32)
    params = init_patchifier_params(kp)

    outs = patchifier_forward(params, images, patches_per_image=ppi, rng=kr)
    outs = jax.block_until_ready(outs)

    fmap, gmap, imap_p, patches, index, scores = outs
    h, w = H // 4, W // 4
    assert fmap.shape == (b, n, DIM_FNET, h, w)
    assert gmap.shape == (b, n * ppi, DIM_FNET, 3, 3)
    assert imap_p.shape == (b, n * ppi, DIM, 1, 1)
    assert patches.shape == (b, n * ppi, 3, 3, 3)
    assert index.shape == (n * ppi,)
    assert scores.shape == (n, ppi)
    assert bool(jnp.all(jnp.isfinite(fmap.astype(jnp.float32))))
    assert bool(jnp.all(jnp.isfinite(gmap.astype(jnp.float32))))
    assert bool(jnp.all(jnp.isfinite(imap_p.astype(jnp.float32))))
    assert bool(jnp.all(jnp.isfinite(scores)))

    print("KERNEL_OK")
</pallas_src>

<mosaic_0001>
module attributes {stable_mosaic.version = 11 : i64} {
  func.func @_fused_matmul_kernel(%arg0: i32, %arg1: memref<64x80xbf16, #tpu.memory_space<vmem>>, %arg2: memref<80x512xbf16, #tpu.memory_space<vmem>>, %arg3: memref<80x128xbf16, #tpu.memory_space<vmem>>, %arg4: memref<1x512xf32, #tpu.memory_space<vmem>>, %arg5: memref<64x512xbf16, #tpu.memory_space<vmem>>, %arg6: memref<64x1xf32, #tpu.memory_space<vmem>>) attributes {dimension_semantics = [#tpu.dimension_semantics<parallel>], iteration_bounds = array<i64: 2>, scalar_prefetch = 0 : i64, scratch_operands = 0 : i64, tpu.core_type = #tpu.core_type<tc>, window_params = [{transform_indices = @transform_0, window_bounds = array<i64: 64, 80>}, {pipeline_mode = #tpu.pipeline_mode<synchronous>, transform_indices = @transform_1, window_bounds = array<i64: 80, 512>}, {pipeline_mode = #tpu.pipeline_mode<synchronous>, transform_indices = @transform_2, window_bounds = array<i64: 80, 128>}, {pipeline_mode = #tpu.pipeline_mode<synchronous>, transform_indices = @transform_3, window_bounds = array<i64: 1, 512>}, {transform_indices = @transform_4, window_bounds = array<i64: 64, 512>}, {transform_indices = @transform_5, window_bounds = array<i64: 64, 1>}]} {
    %c0 = arith.constant 0 : index
    %c0_0 = arith.constant 0 : index
    %0 = vector.load %arg1[%c0, %c0_0] : memref<64x80xbf16, #tpu.memory_space<vmem>>, vector<64x80xbf16>
    %c0_1 = arith.constant 0 : index
    %c0_2 = arith.constant 0 : index
    %1 = vector.load %arg2[%c0_1, %c0_2] : memref<80x512xbf16, #tpu.memory_space<vmem>>, vector<80x512xbf16>
    %cst = arith.constant dense<0.000000e+00> : vector<64x512xf32>
    %2 = tpu.matmul %0, %1, %cst {dimension_numbers = #tpu.dot_dimension_numbers<[1], [0], [0], [1], [0, 0, 1, 1], [], []>} : vector<64x80xbf16>, vector<80x512xbf16>, vector<64x512xf32> -> vector<64x512xf32>
    %c0_3 = arith.constant 0 : index
    %c0_4 = arith.constant 0 : index
    %3 = vector.load %arg4[%c0_3, %c0_4] : memref<1x512xf32, #tpu.memory_space<vmem>>, vector<1x512xf32>
    %4 = vector.broadcast %3 : vector<1x512xf32> to vector<64x512xf32>
    %5 = arith.addf %2, %4 : vector<64x512xf32>
    %6 = tpu.iota {dimensions = array<i32: 1>} : vector<1x512xi32>
    %c128_i32 = arith.constant 128 : i32
    %7 = vector.broadcast %c128_i32 : i32 to vector<1x512xi32>
    %8 = arith.cmpi slt, %6, %7 : vector<1x512xi32>
    %cst_5 = arith.constant 0.000000e+00 : f32
    %9 = vector.broadcast %cst_5 : f32 to vector<64x512xf32>
    %10 = arith.maximumf %5, %9 : vector<64x512xf32>
    %11 = vector.shape_cast %8 : vector<1x512xi1> to vector<1x512xi1>
    %12 = vector.broadcast %11 : vector<1x512xi1> to vector<64x512xi1>
    %13 = arith.select %12, %10, %5 : vector<64x512xi1>, vector<64x512xf32>
    %14 = arith.truncf %13 : vector<64x512xf32> to vector<64x512xbf16>
    %c0_6 = arith.constant 0 : index
    %c0_7 = arith.constant 0 : index
    %15 = vector.load %arg5[%c0_6, %c0_7] : memref<64x512xbf16, #tpu.memory_space<vmem>>, vector<64x512xbf16>
    tpu.vector_store %arg5[%c0_6, %c0_7], %14 {strides = array<i32>} : memref<64x512xbf16, #tpu.memory_space<vmem>>, vector<64x512xbf16>,
    %c0_8 = arith.constant 0 : index
    %c0_9 = arith.constant 0 : index
    %16 = vector.load %arg3[%c0_8, %c0_9] : memref<80x128xbf16, #tpu.memory_space<vmem>>, vector<80x128xbf16>
    %cst_10 = arith.constant dense<0.000000e+00> : vector<64x128xf32>
    %17 = tpu.matmul %0, %16, %cst_10 {dimension_numbers = #tpu.dot_dimension_numbers<[1], [0], [0], [1], [0, 0, 1, 1], [], []>} : vector<64x80xbf16>, vector<80x128xbf16>, vector<64x128xf32> -> vector<64x128xf32>
    %18 = vector.extract_strided_slice %17 {offsets = [0, 0], sizes = [64, 1], strides = [1, 1]} : vector<64x128xf32> to vector<64x1xf32>
    %c0_11 = arith.constant 0 : index
    %c0_12 = arith.constant 0 : index
    %19 = vector.load %arg6[%c0_11, %c0_12] : memref<64x1xf32, #tpu.memory_space<vmem>>, vector<64x1xf32>
    tpu.vector_store %arg6[%c0_11, %c0_12], %18 {strides = array<i32>} : memref<64x1xf32, #tpu.memory_space<vmem>>, vector<64x1xf32>,
    return
  }
  func.func @transform_0(%arg0: i32) -> (i32, i32) {
    %c0_i32 = arith.constant 0 : i32
    %c0_i32_0 = arith.constant 0 : i32
    return %arg0, %c0_i32 : i32, i32
  }
  func.func @transform_1(%arg0: i32) -> (i32, i32) {
    %c0_i32 = arith.constant 0 : i32
    %c0_i32_0 = arith.constant 0 : i32
    %c0_i32_1 = arith.constant 0 : i32
    return %c0_i32, %c0_i32_0 : i32, i32
  }
  func.func @transform_2(%arg0: i32) -> (i32, i32) {
    %c0_i32 = arith.constant 0 : i32
    %c0_i32_0 = arith.constant 0 : i32
    %c0_i32_1 = arith.constant 0 : i32
    return %c0_i32, %c0_i32_0 : i32, i32
  }
  func.func @transform_3(%arg0: i32) -> (i32, i32) {
    %c0_i32 = arith.constant 0 : i32
    %c0_i32_0 = arith.constant 0 : i32
    %c0_i32_1 = arith.constant 0 : i32
    return %c0_i32, %c0_i32_0 : i32, i32
  }
  func.func @transform_4(%arg0: i32) -> (i32, i32) {
    %c0_i32 = arith.constant 0 : i32
    %c0_i32_0 = arith.constant 0 : i32
    return %arg0, %c0_i32 : i32, i32
  }
  func.func @transform_5(%arg0: i32) -> (i32, i32) {
    %c0_i32 = arith.constant 0 : i32
    %c0_i32_0 = arith.constant 0 : i32
    return %arg0, %c0_i32 : i32, i32
  }
}

</mosaic_0001>

<llo_original>
// kernel: tpu_custom_call.1
$region0: #{tpu_custom_call.1}
  #allocation0 [shape = 'u32[]', space=smem, size = 0x4, offset = 0x4, fixed_abs, tag = 'smem constant byte address 0x4 - core index']
  #allocation1 [shape = 'u32[144,128]{1,0:T(1,128)}', space=vmem, size = 0x12000, scoped, tag = 'internal scratch']
  %s0 = inlined_call_operand.vmem [shape: bf16[128,80], index: 0, kind: input, shape index: {}]
  %s1 = inlined_call_operand.hbm [shape: bf16[80,512], index: 1, kind: input, shape index: {}]
  %s2 = inlined_call_operand.vmem [shape: bf16[80,128], index: 2, kind: input, shape index: {}]
  %s3 = inlined_call_operand.vmem [shape: f32[1,512], index: 3, kind: input, shape index: {}]
  %s4 = inlined_call_operand.hbm [shape: bf16[128,512], index: 4, kind: output, shape index: {0}]
  %s5 = inlined_call_operand.vmem [shape: f32[128,1], index: 5, kind: output, shape index: {1}]
  %6 = xla_tuple %s4, %s5
  %s7 = sld [smem:[#allocation0]]
  $region61: #{tpu_custom_call.1} parent=0
    _
  %s9 = ssub.s32 1, %s7
  %s10 = scalar_select 0, %s9, %s7
  $region1: #{tpu_custom_call.1} parent=0
    #allocation2 [shape = 'u8[81920]{0}', space=vmem, size = 0x14000, scoped, tag = 'input window, operand 1, single buffered']
    #allocation3 [shape = 's32[2]{0}', space=sflag, size = 0x8, scoped, tag = 'scoped memory for tpu_custom_call.1']
    #allocation4 [shape = 's32[2]{0}', space=sflag, size = 0x8, scoped, tag = 'scoped memory for tpu_custom_call.1']
    #allocation5 [shape = 'u8[131072]{0}', space=vmem, size = 0x20000, scoped, tag = 'output window, operand 0']
    %11 = vsyncpa [#allocation3], 0
    %12 = vsyncpa [#allocation4], 0
    %s13 = scalar_lea.sflag [#allocation4], 1
    %14 = vsyncpa %s13, 0
    loop: start=0, step=1, limit=4
    $region2: #{tpu_custom_call.1} parent=1 // loop_pre_header
      _
    $region3: #{tpu_custom_call.1} parent=1 // loop_header
      %s16 = sphi 0, %s20
      %p17 = scmp.ge.s32.totalorder %s16, 4
      %s26 = sphi 0, %s28
      %s29 = sphi 0, %s26
      %s30 = sphi 0, %s29
      %s46 = sphi 0, %s30
      %s50 = sphi 0, %s50
      %s52 = sphi 0, %s50
      %s53 = sphi 0, %s52
      %s67 = sphi 0, %s53
      %s71 = sphi 0, %s71
      %s73 = sphi 0, %s71
      %s74 = sphi 0, %s73
      %s88 = sphi 0, %s74
      %s92 = sphi 0, %s92
      %s94 = sphi 0, %s92
      %s95 = sphi 0, %s94
      %s109 = sphi 0, %s95
      %s115 = sphi 0, %s117
      %s118 = sphi 0, %s115
      %s119 = sphi 0, %s118
      %s135 = sphi 0, %s119
      %s141 = sphi 0, %s143
      %s144 = sphi 0, %s141
      %s145 = sphi 0, %s144
      %s161 = sphi 0, %s145
    $region4: #{tpu_custom_call.1} parent=1 // loop_header_branch
      %19 = sbr.rel (%p17) target = $region8
    $region5: #{tpu_custom_call.1} parent=1 // loop_body
      %s21 = ssub.s32 %s16, 1
      %s22 = ssub.s32 %s16, 2
      %s23 = sadd.s32 %s16, 1
      %s24 = ssub.s32 %s16, %s23
      %p25 = scmp.eq.s32.totalorder %s24, 0
      %s27 = sadd.s32 %s26, 1
      %s28 = scalar_select %p25, %s26, %s27
      %p31 = pneg %p25
      %p32 = scmp.eq.s32.totalorder %s16, 1
      %p33 = por %p31, %p32
      %p34 = scmp.ne.s32.totalorder %s26, %s29
      %p35 = scmp.eq.s32.totalorder %s16, 0
      %p36 = por %p34, %p35
      %p37 = scmp.ne.s32.totalorder %s26, %s29
      %p38 = scmp.eq.s32.totalorder %s21, 1
      %p39 = por %p37, %p38
      %p40 = scmp.ne.s32.totalorder %s29, %s30
      %p41 = scmp.eq.s32.totalorder %s21, 0
      %p42 = por %p40, %p41
      %p43 = scmp.ne.s32.totalorder %s29, %s30
      %p44 = scmp.eq.s32.totalorder %s22, 1
      %p45 = por %p43, %p44
      %p47 = scmp.ne.s32.totalorder %s30, %s46
      %p48 = scmp.eq.s32.totalorder %s22, 0
      %p49 = por %p47, %p48
      %s51 = sadd.s32 %s50, 1
      %p54 = scmp.eq.s32.totalorder %s16, 1
      %p55 = scmp.ne.s32.totalorder %s50, %s52
      %p56 = scmp.eq.s32.totalorder %s16, 0
      %p57 = por %p55, %p56
      %p58 = scmp.ne.s32.totalorder %s50, %s52
      %p59 = scmp.eq.s32.totalorder %s21, 1
      %p60 = por %p58, %p59
      %p61 = scmp.ne.s32.totalorder %s52, %s53
      %p62 = scmp.eq.s32.totalorder %s21, 0
      %p63 = por %p61, %p62
      %p64 = scmp.ne.s32.totalorder %s52, %s53
      %p65 = scmp.eq.s32.totalorder %s22, 1
      %p66 = por %p64, %p65
      %p68 = scmp.ne.s32.totalorder %s53, %s67
      %p69 = scmp.eq.s32.totalorder %s22, 0
      %p70 = por %p68, %p69
      %s72 = sadd.s32 %s71, 1
      %p75 = scmp.eq.s32.totalorder %s16, 1
      %p76 = scmp.ne.s32.totalorder %s71, %s73
      %p77 = scmp.eq.s32.totalorder %s16, 0
      %p78 = por %p76, %p77
      %p79 = scmp.ne.s32.totalorder %s71, %s73
      %p80 = scmp.eq.s32.totalorder %s21, 1
      %p81 = por %p79, %p80
      %p82 = scmp.ne.s32.totalorder %s73, %s74
      %p83 = scmp.eq.s32.totalorder %s21, 0
      %p84 = por %p82, %p83
      %p85 = scmp.ne.s32.totalorder %s73, %s74
      %p86 = scmp.eq.s32.totalorder %s22, 1
      %p87 = por %p85, %p86
      %p89 = scmp.ne.s32.totalorder %s74, %s88
      %p90 = scmp.eq.s32.totalorder %s22, 0
      %p91 = por %p89, %p90
      %s93 = sadd.s32 %s92, 1
      %p96 = scmp.eq.s32.totalorder %s16, 1
      %p97 = scmp.ne.s32.totalorder %s92, %s94
      %p98 = scmp.eq.s32.totalorder %s16, 0
      %p99 = por %p97, %p98
      %p100 = scmp.ne.s32.totalorder %s92, %s94
      %p101 = scmp.eq.s32.totalorder %s21, 1
      %p102 = por %p100, %p101
      %p103 = scmp.ne.s32.totalorder %s94, %s95
      %p104 = scmp.eq.s32.totalorder %s21, 0
      %p105 = por %p103, %p104
      %p106 = scmp.ne.s32.totalorder %s94, %s95
      %p107 = scmp.eq.s32.totalorder %s22, 1
      %p108 = por %p106, %p107
      %p110 = scmp.ne.s32.totalorder %s95, %s109
      %p111 = scmp.eq.s32.totalorder %s22, 0
      %p112 = por %p110, %p111
      %s113 = ssub.s32 %s16, %s23
      %p114 = scmp.eq.s32.totalorder %s113, 0
      %s116 = sadd.s32 %s115, 1
      %s117 = scalar_select %p114, %s115, %s116
      %p120 = pneg %p114
      %p121 = scmp.eq.s32.totalorder %s16, 1
      %p122 = por %p120, %p121
      %p123 = scmp.ne.s32.totalorder %s115, %s118
      %p124 = scmp.eq.s32.totalorder %s16, 0
      %p125 = por %p123, %p124
      %p126 = scmp.ne.s32.totalorder %s115, %s118
      %p127 = scmp.eq.s32.totalorder %s21, 1
      %p128 = por %p126, %p127
      %p129 = scmp.ne.s32.totalorder %s118, %s119
      %p130 = scmp.eq.s32.totalorder %s21, 0
      %p131 = por %p129, %p130
      %p132 = scmp.ne.s32.totalorder %s118, %s119
      %p133 = scmp.eq.s32.totalorder %s22, 1
      %p134 = por %p132, %p133
      %p136 = scmp.ne.s32.totalorder %s119, %s135
      %p137 = scmp.eq.s32.totalorder %s22, 0
      %p138 = por %p136, %p137
      %s139 = ssub.s32 %s16, %s23
      %p140 = scmp.eq.s32.totalorder %s139, 0
      %s142 = sadd.s32 %s141, 1
      %s143 = scalar_select %p140, %s141, %s142
      %p146 = pneg %p140
      %p147 = scmp.eq.s32.totalorder %s16, 1
      %p148 = por %p146, %p147
      %p149 = scmp.ne.s32.totalorder %s141, %s144
      %p150 = scmp.eq.s32.totalorder %s16, 0
      %p151 = por %p149, %p150
      %p152 = scmp.ne.s32.totalorder %s141, %s144
      %p153 = scmp.eq.s32.totalorder %s21, 1
      %p154 = por %p152, %p153
      %p155 = scmp.ne.s32.totalorder %s144, %s145
      %p156 = scmp.eq.s32.totalorder %s21, 0
      %p157 = por %p155, %p156
      %p158 = scmp.ne.s32.totalorder %s144, %s145
      %p159 = scmp.eq.s32.totalorder %s22, 1
      %p160 = por %p158, %p159
      %p162 = scmp.ne.s32.totalorder %s145, %s161
      %p163 = scmp.eq.s32.totalorder %s22, 0
      %p164 = por %p162, %p163
      %p165 = scmp.le.s32.totalorder 1, %s16
      %p166 = scmp.lt.s32.totalorder %s16, 3
      %p167 = pnand %p165, %p166
      %p168 = pneg %p167
      // Predicated region
      $region9: #{tpu_custom_call.1} parent=5 // pred_check
        _
      $region10: #{tpu_custom_call.1} parent=5 // pred_check_branch
        %170 = sbr.rel (%p167) target = $region12
      $region11: #{tpu_custom_call.1} parent=5 // pred_region
        %s171 = ssub.s32 %s16, 1
        // Predicated region
        $region13: #{tpu_custom_call.1} parent=11 // pred_check
          %p172 = pneg %p63
        $region14: #{tpu_custom_call.1} parent=11 // pred_check_branch
          %174 = sbr.rel (%p172) target = $region16
        $region15: #{tpu_custom_call.1} parent=11 // pred_region
          %s176 = ssub.s32 2560, 2560
          %177 = vsyncadd [#allocation3], %s176
          %s178 = sshll.u32 [#allocation2], 4
          %s179 = int_to_ptr.vmem [resolvable:$true] %s178
          %184 = dma.hbm_to_vmem [thread:$0]  %s1, 2560, %s179, [#allocation3], 256, 256, 16
        $region16: #{tpu_custom_call.1} parent=11 // pred_fallthru
          _
        // Predicated region
        $region17: #{tpu_custom_call.1} parent=11 // pred_check
          %p185 = pneg %p84
        $region18: #{tpu_custom_call.1} parent=11 // pred_check_branch
          %187 = sbr.rel (%p185) target = $region20
        $region19: #{tpu_custom_call.1} parent=11 // pred_region
          _
        $region20: #{tpu_custom_call.1} parent=11 // pred_fallthru
          _
        // Predicated region
        $region21: #{tpu_custom_call.1} parent=11 // pred_check
          %p188 = pneg %p105
        $region22: #{tpu_custom_call.1} parent=11 // pred_check_branch
          %190 = sbr.rel (%p188) target = $region24
        $region23: #{tpu_custom_call.1} parent=11 // pred_region
          _
        $region24: #{tpu_custom_call.1} parent=11 // pred_fallthru
          _
      $region12: #{tpu_custom_call.1} parent=5 // pred_fallthru
        _
      %p191 = scmp.lt.s32.totalorder %s16, 2
      // Predicated region
      $region25: #{tpu_custom_call.1} parent=5 // pred_check
        %p192 = pneg %p191
      $region26: #{tpu_custom_call.1} parent=5 // pred_check_branch
        %194 = sbr.rel (%p192) target = $region28
      $region27: #{tpu_custom_call.1} parent=5 // pred_region
        // Predicated region
        $region29: #{tpu_custom_call.1} parent=27 // pred_check
          %p195 = pneg %p36
        $region30: #{tpu_custom_call.1} parent=27 // pred_check_branch
          %197 = sbr.rel (%p195) target = $region32
        $region31: #{tpu_custom_call.1} parent=27 // pred_region
          %s198 = smul.u32 8, %s16
          %p199 = scmp.lt.s32.totalorder %s198, 15
          %s200 = scalar_select %p199, %s198, 15
          %s201 = smul.addr %s200, 4
          %s202 = scalar_lea.vmem %s0, %s201
          %s203 = smul.u32 8, %s16
        $region32: #{tpu_custom_call.1} parent=27 // pred_fallthru
          _
      $region28: #{tpu_custom_call.1} parent=5 // pred_fallthru
        _
      %p204 = scmp.le.s32.totalorder 1, %s16
      %p205 = scmp.lt.s32.totalorder %s16, 3
      %p206 = pnand %p204, %p205
      %p207 = pneg %p206
      // Predicated region
      $region33: #{tpu_custom_call.1} parent=5 // pred_check
        _
      $region34: #{tpu_custom_call.1} parent=5 // pred_check_branch
        %209 = sbr.rel (%p206) target = $region36
      $region35: #{tpu_custom_call.1} parent=5 // pred_region
        %s210 = ssub.s32 %s16, 1
        // Predicated region
        $region37: #{tpu_custom_call.1} parent=35 // pred_check
          %p211 = pneg %p63
        $region38: #{tpu_custom_call.1} parent=35 // pred_check_branch
          %213 = sbr.rel (%p211) target = $region40
        $region39: #{tpu_custom_call.1} parent=35 // pred_region
          %214 = dma.done [#allocation3], 2560
        $region40: #{tpu_custom_call.1} parent=35 // pred_fallthru
          _
        %s215 = smul.u32 8, %s21
        %p216 = scmp.lt.s32.totalorder %s215, 15
        %s217 = scalar_select %p216, %s215, 15
        %s218 = smul.addr %s217, 4
        %s219 = scalar_lea.vmem %s0, %s218
        %p220 = pneg %p42
        %p221 = pneg %p39
        %p222 = pneg %p63
        %p223 = pneg %p60
        %p224 = pneg %p84
        %p225 = pneg %p81
        %p226 = pneg %p105
        %p227 = pneg %p102
        %p228 = pneg %p131
        %p229 = pneg %p128
        %s230 = sand.u32 %s118, 1
        %s231 = scalar_lea.sflag [#allocation4], %s230
        %s232 = sand.u32 %s118, 1
        %s233 = smul.addr %s232, 128
        %s234 = scalar_lea.vmem [#allocation5], %s233
        %p235 = pneg %p157
        %p236 = pneg %p154
        %s237 = smul.u32 8, %s21
        %p238 = scmp.lt.s32.totalorder %s237, 15
        %s239 = scalar_select %p238, %s237, 15
        %s240 = smul.addr %s239, 8
        %s241 = scalar_lea.vmem %s5, %s240
        %s242 = smul.u32 8, %s21
        %p243 = scmp.lt.s32.totalorder %s242, 15
        %s244 = scalar_select %p243, %s242, 15
        %s245 = smul.addr %s244, 4
        %s246 = scalar_lea.vmem %s0, %s245
        %s247 = smul.u32 8, %s21
        %s248 = smul.u32 8, %s21
        %s249 = smul.u32 8, %s21
        %p250 = scmp.lt.s32.totalorder %s249, 15
        %s251 = scalar_select %p250, %s249, 15
        %s252 = smul.addr %s251, 8
        %s253 = scalar_lea.vmem %s5, %s252
        %s254 = smul.u32 8, %s21
        %v256 = vld [vmem:[%s246] sm:$0xf]
        %v257 = vld [vmem:[%s246 + $0x4] sm:$0xf]
        %v258 = vld [vmem:[%s246 + $0x8] sm:$0xf]
        %v259 = vld [vmem:[%s246 + $0xc] sm:$0xf]
        %v260 = vld [vmem:[%s246 + $0x10] sm:$0xf]
        %v261 = vld [vmem:[%s246 + $0x14] sm:$0xf]
        %v262 = vld [vmem:[%s246 + $0x18] sm:$0xf]
        %v263 = vld [vmem:[%s246 + $0x1c] sm:$0xf]
        %v264 = vld [vmem:[#allocation2] sm:$0xff]
        %v265 = vld [vmem:[#allocation2 + $0x8] sm:$0xff]
        %v266 = vld [vmem:[#allocation2 + $0x10] sm:$0xff]
        %v267 = vld [vmem:[#allocation2 + $0x18] sm:$0xff]
        %v268 = vld [vmem:[#allocation2 + $0x20] sm:$0xff]
        %v269 = vld [vmem:[#allocation2 + $0x28] sm:$0xff]
        %v270 = vld [vmem:[#allocation2 + $0x30] sm:$0xff]
        %v271 = vld [vmem:[#allocation2 + $0x38] sm:$0xff]
        %v272 = vld [vmem:[#allocation2 + $0x40] sm:$0xff]
        %v273 = vld [vmem:[#allocation2 + $0x48] sm:$0xff]
        %v274 = vld [vmem:[#allocation2 + $0x50] sm:$0xff]
        %v275 = vld [vmem:[#allocation2 + $0x58] sm:$0xff]
        %v276 = vld [vmem:[#allocation2 + $0x60] sm:$0xff]
        %v277 = vld [vmem:[#allocation2 + $0x68] sm:$0xff]
        %v278 = vld [vmem:[#allocation2 + $0x70] sm:$0xff]
        %v279 = vld [vmem:[#allocation2 + $0x78] sm:$0xff]
        %v280 = vld [vmem:[#allocation2 + $0x80] sm:$0xff]
        %v281 = vld [vmem:[#allocation2 + $0x88] sm:$0xff]
        %v282 = vld [vmem:[#allocation2 + $0x90] sm:$0xff]
        %v283 = vld [vmem:[#allocation2 + $0x98] sm:$0xff]
        %v284 = vld [vmem:[%s3] sm:$0xf]
        %v286 = vlaneseq
        %v287 = vshrl.u32 %v286, 7
        %v288 = vsub.s32 0, %v287
        %v289 = vrot.slane %v284, %v288
        %v290 = vlaneseq
        %v291 = vshrl.u32 %v290, 7
        %v292 = vsub.s32 1, %v291
        %v293 = vrot.slane %v284, %v292
        %v294 = vlaneseq
        %v295 = vshrl.u32 %v294, 7
        %v296 = vsub.s32 2, %v295
        %v297 = vrot.slane %v284, %v296
        %v298 = vlaneseq
        %v299 = vshrl.u32 %v298, 7
        %v300 = vsub.s32 3, %v299
        %v301 = vrot.slane %v284, %v300
        %v314 = vunpack.c.l.b16 %v256
        %v315 = vunpack.c.l.b16 %v257
        %v316 = vunpack.c.l.b16 %v258
        %v317 = vunpack.c.l.b16 %v259
        %v318 = vunpack.c.l.b16 %v260
        %v319 = vunpack.c.l.b16 %v261
        %v320 = vunpack.c.l.b16 %v262
        %v321 = vunpack.c.l.b16 %v263
        %v322 = vpack.c.b16 %v315, %v314
        %v323 = vpack.c.b16 %v317, %v316
        %v324 = vpack.c.b16 %v319, %v318
        %v325 = vpack.c.b16 %v321, %v320
        %v346 = vunpack.c.l.b16 %v264
        %v347 = vunpack.c.h.b16 %v264
        %v348 = vunpack.c.l.b16 %v265
        %v349 = vunpack.c.h.b16 %v265
        %v350 = vunpack.c.l.b16 %v266
        %v351 = vunpack.c.h.b16 %v266
        %v352 = vunpack.c.l.b16 %v267
        %v353 = vunpack.c.h.b16 %v267
        %v354 = vunpack.c.l.b16 %v268
        %v355 = vunpack.c.h.b16 %v268
        %v356 = vunpack.c.l.b16 %v269
        %v357 = vunpack.c.h.b16 %v269
        %v358 = vunpack.c.l.b16 %v270
        %v359 = vunpack.c.h.b16 %v270
        %v360 = vunpack.c.l.b16 %v271
        %v361 = vunpack.c.h.b16 %v271
        %v362 = vunpack.c.l.b16 %v272
        %v363 = vunpack.c.h.b16 %v272
        %v364 = vunpack.c.l.b16 %v273
        %v365 = vunpack.c.h.b16 %v273
        %v366 = vunpack.c.l.b16 %v274
        %v367 = vunpack.c.h.b16 %v274
        %v368 = vunpack.c.l.b16 %v275
        %v369 = vunpack.c.h.b16 %v275
        %v370 = vunpack.c.l.b16 %v276
        %v371 = vunpack.c.h.b16 %v276
        %v372 = vunpack.c.l.b16 %v277
        %v373 = vunpack.c.h.b16 %v277
        %v374 = vunpack.c.l.b16 %v278
        %v375 = vunpack.c.h.b16 %v278
        %v376 = vunpack.c.l.b16 %v279
        %v377 = vunpack.c.h.b16 %v279
        %v378 = vunpack.c.l.b16 %v280
        %v379 = vunpack.c.h.b16 %v280
        %v380 = vunpack.c.l.b16 %v281
        %v381 = vunpack.c.h.b16 %v281
        %v382 = vunpack.c.l.b16 %v282
        %v383 = vunpack.c.h.b16 %v282
        %v384 = vunpack.c.l.b16 %v283
        %v385 = vunpack.c.h.b16 %v283
        %v386 = vpack.c.b16 %v350, %v346
        %v387 = vpack.c.b16 %v351, %v347
        %v388 = vpack.c.b16 %v352, %v348
        %v389 = vpack.c.b16 %v353, %v349
        %v390 = vpack.c.b16 %v358, %v354
        %v391 = vpack.c.b16 %v359, %v355
        %v392 = vpack.c.b16 %v360, %v356
        %v393 = vpack.c.b16 %v361, %v357
        %v394 = vpack.c.b16 %v366, %v362
        %v395 = vpack.c.b16 %v367, %v363
        %v396 = vpack.c.b16 %v368, %v364
        %v397 = vpack.c.b16 %v369, %v365
        %v398 = vpack.c.b16 %v374, %v370
        %v399 = vpack.c.b16 %v375, %v371
        %v400 = vpack.c.b16 %v376, %v372
        %v401 = vpack.c.b16 %v377, %v373
        %v402 = vpack.c.b16 %v382, %v378
        %v403 = vpack.c.b16 %v383, %v379
        %v404 = vpack.c.b16 %v384, %v380
        %v405 = vpack.c.b16 %v385, %v381
        %vm426 = vcmask 654336
        %v428 = vsel %vm426, %v322, 0
        %v431 = vsel %vm426, %v323, 0
        %v434 = vsel %vm426, %v324, 0
        %v437 = vsel %vm426, %v325, 0
        %439 = vmatprep.subr.bf16.mxu0 %v387
        %440 = vmatpush1.bf16.msra.mxu0 %v386
        %441 = vmatprep.subr.bf16.mxu0 %v391
        %442 = vmatpush1.bf16.msra.mxu0 %v390
        %443 = vmatprep.subr.bf16.mxu0 %v395
        %444 = vmatpush1.bf16.msra.mxu0 %v394
        %445 = vmatprep.subr.bf16.mxu0 %v399
        %446 = vmatpush1.bf16.msra.mxu0 %v398
        %447 = vmatprep.subr.bf16.mxu0 %v403
        %448 = vmatpush1.bf16.msra.mxu0 %v402
        %449 = vmatprep.subr.bf16.mxu0 0
        %450 = vmatpush1.bf16.msra.mxu0 0
        %451 = vmatprep.subr.bf16.mxu0 0
        %452 = vmatpush1.bf16.msra.mxu0 0
        %453 = vmatprep.subr.bf16.mxu0 0
        %454 = vmatpush1.bf16.msra.mxu0 0
        %455 = vmatprep.subr.bf16.mxu0 0
        %456 = vmatpush1.bf16.msra.mxu0 0
        %457 = vmatprep.subr.bf16.mxu0 0
        %458 = vmatpush1.bf16.msra.mxu0 0
        %459 = vmatprep.subr.bf16.mxu0 0
        %460 = vmatpush1.bf16.msra.mxu0 0
        %461 = vmatprep.subr.bf16.mxu0 0
        %462 = vmatpush1.bf16.msra.mxu0 0
        %463 = vmatprep.subr.bf16.mxu0 0
        %464 = vmatpush1.bf16.msra.mxu0 0
        %465 = vmatprep.subr.bf16.mxu0 0
        %466 = vmatpush1.bf16.msra.mxu0 0
        %467 = vmatprep.subr.bf16.mxu0 0
        %468 = vmatpush1.bf16.msra.mxu0 0
        %469 = vmatprep.subr.bf16.mxu0 0
        %470 = vmatpush1.bf16.msra.mxu0 0
        %471 = vmatprep.mubr.bf16.mxu0 0
        %472 = vmatmul.mubr.bf16.gmra.mrb[0].mxu0 %v428
        %v473 = vpop.f32.mrb[0].mxu0
        %v474 = vadd.f32 %v289, %v473
        %v475 = vpop.f32.mrb[0].mxu0
        %v476 = vadd.f32 %v293, %v475
        %v477 = vpop.f32.mrb[0].mxu0
        %v478 = vadd.f32 %v289, %v477
        %v479 = vpop.f32.mrb[0].mxu0
        %v480 = vadd.f32 %v293, %v479
        %481 = vmatprep.mubr.bf16.mxu0 0
        %482 = vmatmul.mubr.bf16.gmra.mrb[0].mxu0 %v431
        %v483 = vpop.f32.mrb[0].mxu0
        %v484 = vadd.f32 %v289, %v483
        %v485 = vpop.f32.mrb[0].mxu0
        %v486 = vadd.f32 %v293, %v485
        %v487 = vpop.f32.mrb[0].mxu0
        %v488 = vadd.f32 %v289, %v487
        %v489 = vpop.f32.mrb[0].mxu0
        %v490 = vadd.f32 %v293, %v489
        %491 = vmatprep.mubr.bf16.mxu0 0
        %492 = vmatmul.mubr.bf16.gmra.mrb[0].mxu0 %v434
        %v493 = vpop.f32.mrb[0].mxu0
        %v494 = vadd.f32 %v289, %v493
        %v495 = vpop.f32.mrb[0].mxu0
        %v496 = vadd.f32 %v293, %v495
        %v497 = vpop.f32.mrb[0].mxu0
        %v498 = vadd.f32 %v289, %v497
        %v499 = vpop.f32.mrb[0].mxu0
        %v500 = vadd.f32 %v293, %v499
        %501 = vmatprep.mubr.bf16.mxu0 0
        %502 = vmatmul.mubr.bf16.gmra.mrb[0].mxu0 %v437
        %v503 = vpop.f32.mrb[0].mxu0
        %v504 = vadd.f32 %v289, %v503
        %v505 = vpop.f32.mrb[0].mxu0
        %v506 = vadd.f32 %v293, %v505
        %v507 = vpop.f32.mrb[0].mxu0
        %v508 = vadd.f32 %v289, %v507
        %v509 = vpop.f32.mrb[0].mxu0
        %v510 = vadd.f32 %v293, %v509
        %511 = vdwg.mxu0
        %512 = vmatprep.subr.bf16.mxu0 %v389
        %513 = vmatpush1.bf16.msra.mxu0 %v388
        %514 = vmatprep.subr.bf16.mxu0 %v393
        %515 = vmatpush1.bf16.msra.mxu0 %v392
        %516 = vmatprep.subr.bf16.mxu0 %v397
        %517 = vmatpush1.bf16.msra.mxu0 %v396
        %518 = vmatprep.subr.bf16.mxu0 %v401
        %519 = vmatpush1.bf16.msra.mxu0 %v400
        %520 = vmatprep.subr.bf16.mxu0 %v405
        %521 = vmatpush1.bf16.msra.mxu0 %v404
        %522 = vmatprep.subr.bf16.mxu0 0
        %523 = vmatpush1.bf16.msra.mxu0 0
        %524 = vmatprep.subr.bf16.mxu0 0
        %525 = vmatpush1.bf16.msra.mxu0 0
        %526 = vmatprep.subr.bf16.mxu0 0
        %527 = vmatpush1.bf16.msra.mxu0 0
        %528 = vmatprep.subr.bf16.mxu0 0
        %529 = vmatpush1.bf16.msra.mxu0 0
        %530 = vmatprep.subr.bf16.mxu0 0
        %531 = vmatpush1.bf16.msra.mxu0 0
        %532 = vmatprep.subr.bf16.mxu0 0
        %533 = vmatpush1.bf16.msra.mxu0 0
        %534 = vmatprep.subr.bf16.mxu0 0
        %535 = vmatpush1.bf16.msra.mxu0 0
        %536 = vmatprep.subr.bf16.mxu0 0
        %537 = vmatpush1.bf16.msra.mxu0 0
        %538 = vmatprep.subr.bf16.mxu0 0
        %539 = vmatpush1.bf16.msra.mxu0 0
        %540 = vmatprep.subr.bf16.mxu0 0
        %541 = vmatpush1.bf16.msra.mxu0 0
        %542 = vmatprep.subr.bf16.mxu0 0
        %543 = vmatpush1.bf16.msra.mxu0 0
        %544 = vmatprep.mubr.bf16.mxu0 0
        %545 = vmatmul.mubr.bf16.gmra.mrb[0].mxu0 %v428
        %v546 = vpop.f32.mrb[0].mxu0
        %v547 = vadd.f32 %v297, %v546
        %v548 = vpop.f32.mrb[0].mxu0
        %v549 = vadd.f32 %v301, %v548
        %v550 = vpop.f32.mrb[0].mxu0
        %v551 = vadd.f32 %v297, %v550
        %v552 = vpop.f32.mrb[0].mxu0
        %v553 = vadd.f32 %v301, %v552
        %554 = vmatprep.mubr.bf16.mxu0 0
        %555 = vmatmul.mubr.bf16.gmra.mrb[0].mxu0 %v431
        %v556 = vpop.f32.mrb[0].mxu0
        %v557 = vadd.f32 %v297, %v556
        %v558 = vpop.f32.mrb[0].mxu0
        %v559 = vadd.f32 %v301, %v558
        %v560 = vpop.f32.mrb[0].mxu0
        %v561 = vadd.f32 %v297, %v560
        %v562 = vpop.f32.mrb[0].mxu0
        %v563 = vadd.f32 %v301, %v562
        %564 = vmatprep.mubr.bf16.mxu0 0
        %565 = vmatmul.mubr.bf16.gmra.mrb[0].mxu0 %v434
        %v566 = vpop.f32.mrb[0].mxu0
        %v567 = vadd.f32 %v297, %v566
        %v568 = vpop.f32.mrb[0].mxu0
        %v569 = vadd.f32 %v301, %v568
        %v570 = vpop.f32.mrb[0].mxu0
        %v571 = vadd.f32 %v297, %v570
        %v572 = vpop.f32.mrb[0].mxu0
        %v573 = vadd.f32 %v301, %v572
        %574 = vmatprep.mubr.bf16.mxu0 0
        %575 = vmatmul.mubr.bf16.gmra.mrb[0].mxu0 %v437
        %v576 = vpop.f32.mrb[0].mxu0
        %v577 = vadd.f32 %v297, %v576
        %v578 = vpop.f32.mrb[0].mxu0
        %v579 = vadd.f32 %v301, %v578
        %v580 = vpop.f32.mrb[0].mxu0
        %v581 = vadd.f32 %v297, %v580
        %v582 = vpop.f32.mrb[0].mxu0
        %v583 = vadd.f32 %v301, %v582
        %584 = vdwg.mxu0
        %v585 = vlaneseq
        %v586 = vand.u32 %v585, 127
        %v587 = vadd.s32 %v586, 128
        %v588 = vadd.s32 %v586, 256
        %v589 = vadd.s32 %v586, 384
        %vm590 = vcmp.lt.s32.totalorder %v586, 128
        %vm591 = vcmp.lt.s32.totalorder %v587, 128
        %vm592 = vcmp.lt.s32.totalorder %v588, 128
        %vm593 = vcmp.lt.s32.totalorder %v589, 128
        %v594 = vmax.f32 %v474, 0.0
        %v595 = vmax.f32 %v476, 0.0
        %v596 = vmax.f32 %v547, 0.0
        %v597 = vmax.f32 %v549, 0.0
        %v598 = vmax.f32 %v478, 0.0
        %v599 = vmax.f32 %v480, 0.0
        %v600 = vmax.f32 %v551, 0.0
        %v601 = vmax.f32 %v553, 0.0
        %v602 = vmax.f32 %v484, 0.0
        %v603 = vmax.f32 %v486, 0.0
        %v604 = vmax.f32 %v557, 0.0
        %v605 = vmax.f32 %v559, 0.0
        %v606 = vmax.f32 %v488, 0.0
        %v607 = vmax.f32 %v490, 0.0
        %v608 = vmax.f32 %v561, 0.0
        %v609 = vmax.f32 %v563, 0.0
        %v610 = vmax.f32 %v494, 0.0
        %v611 = vmax.f32 %v496, 0.0
        %v612 = vmax.f32 %v567, 0.0
        %v613 = vmax.f32 %v569, 0.0
        %v614 = vmax.f32 %v498, 0.0
        %v615 = vmax.f32 %v500, 0.0
        %v616 = vmax.f32 %v571, 0.0
        %v617 = vmax.f32 %v573, 0.0
        %v618 = vmax.f32 %v504, 0.0
        %v619 = vmax.f32 %v506, 0.0
        %v620 = vmax.f32 %v577, 0.0
        %v621 = vmax.f32 %v579, 0.0
        %v622 = vmax.f32 %v508, 0.0
        %v623 = vmax.f32 %v510, 0.0
        %v624 = vmax.f32 %v581, 0.0
        %v625 = vmax.f32 %v583, 0.0
        %v626 = vsel %vm590, 1, 0
        %v627 = vsel %vm591, 1, 0
        %v628 = vsel %vm592, 1, 0
        %v629 = vsel %vm593, 1, 0
        %vm630 = vcmp.eq.s32.totalorder %v626, 1
        %vm631 = vcmp.eq.s32.totalorder %v627, 1
        %vm632 = vcmp.eq.s32.totalorder %v628, 1
        %vm633 = vcmp.eq.s32.totalorder %v629, 1
        %v634 = vsel %vm630, %v594, %v474
        %v635 = vsel %vm631, %v595, %v476
        %v636 = vsel %vm632, %v596, %v547
        %v637 = vsel %vm633, %v597, %v549
        %v638 = vsel %vm630, %v598, %v478
        %v639 = vsel %vm631, %v599, %v480
        %v640 = vsel %vm632, %v600, %v551
        %v641 = vsel %vm633, %v601, %v553
        %v642 = vsel %vm630, %v602, %v484
        %v643 = vsel %vm631, %v603, %v486
        %v644 = vsel %vm632, %v604, %v557
        %v645 = vsel %vm633, %v605, %v559
        %v646 = vsel %vm630, %v606, %v488
        %v647 = vsel %vm631, %v607, %v490
        %v648 = vsel %vm632, %v608, %v561
        %v649 = vsel %vm633, %v609, %v563
        %v650 = vsel %vm630, %v610, %v494
        %v651 = vsel %vm631, %v611, %v496
        %v652 = vsel %vm632, %v612, %v567
        %v653 = vsel %vm633, %v613, %v569
        %v654 = vsel %vm630, %v614, %v498
        %v655 = vsel %vm631, %v615, %v500
        %v656 = vsel %vm632, %v616, %v571
        %v657 = vsel %vm633, %v617, %v573
        %v658 = vsel %vm630, %v618, %v504
        %v659 = vsel %vm631, %v619, %v506
        %v660 = vsel %vm632, %v620, %v577
        %v661 = vsel %vm633, %v621, %v579
        %v662 = vsel %vm630, %v622, %v508
        %v663 = vsel %vm631, %v623, %v510
        %v664 = vsel %vm632, %v624, %v581
        %v665 = vsel %vm633, %v625, %v583
        %v666 = vpack.c.bf16 %v638, %v634
        %v667 = vpack.c.bf16 %v639, %v635
        %v668 = vpack.c.bf16 %v640, %v636
        %v669 = vpack.c.bf16 %v641, %v637
        %v670 = vpack.c.bf16 %v646, %v642
        %v671 = vpack.c.bf16 %v647, %v643
        %v672 = vpack.c.bf16 %v648, %v644
        %v673 = vpack.c.bf16 %v649, %v645
        %v674 = vpack.c.bf16 %v654, %v650
        %v675 = vpack.c.bf16 %v655, %v651
        %v676 = vpack.c.bf16 %v656, %v652
        %v677 = vpack.c.bf16 %v657, %v653
        %v678 = vpack.c.bf16 %v662, %v658
        %v679 = vpack.c.bf16 %v663, %v659
        %v680 = vpack.c.bf16 %v664, %v660
        %v681 = vpack.c.bf16 %v665, %v661
        %v698 = vunpack.c.l.b16 %v666
        %v699 = vunpack.c.l.b16 %v667
        %v700 = vunpack.c.l.b16 %v668
        %v701 = vunpack.c.l.b16 %v669
        %v702 = vunpack.c.h.b16 %v666
        %v703 = vunpack.c.h.b16 %v667
        %v704 = vunpack.c.h.b16 %v668
        %v705 = vunpack.c.h.b16 %v669
        %v706 = vunpack.c.l.b16 %v670
        %v707 = vunpack.c.l.b16 %v671
        %v708 = vunpack.c.l.b16 %v672
        %v709 = vunpack.c.l.b16 %v673
        %v710 = vunpack.c.h.b16 %v670
        %v711 = vunpack.c.h.b16 %v671
        %v712 = vunpack.c.h.b16 %v672
        %v713 = vunpack.c.h.b16 %v673
        %v714 = vunpack.c.l.b16 %v674
        %v715 = vunpack.c.l.b16 %v675
        %v716 = vunpack.c.l.b16 %v676
        %v717 = vunpack.c.l.b16 %v677
        %v718 = vunpack.c.h.b16 %v674
        %v719 = vunpack.c.h.b16 %v675
        %v720 = vunpack.c.h.b16 %v676
        %v721 = vunpack.c.h.b16 %v677
        %v722 = vunpack.c.l.b16 %v678
        %v723 = vunpack.c.l.b16 %v679
        %v724 = vunpack.c.l.b16 %v680
        %v725 = vunpack.c.l.b16 %v681
        %v726 = vunpack.c.h.b16 %v678
        %v727 = vunpack.c.h.b16 %v679
        %v728 = vunpack.c.h.b16 %v680
        %v729 = vunpack.c.h.b16 %v681
        %v730 = vpack.c.b16 %v699, %v698
        %v731 = vpack.c.b16 %v701, %v700
        %v732 = vpack.c.b16 %v703, %v702
        %v733 = vpack.c.b16 %v705, %v704
        %v734 = vpack.c.b16 %v707, %v706
        %v735 = vpack.c.b16 %v709, %v708
        %v736 = vpack.c.b16 %v711, %v710
        %v737 = vpack.c.b16 %v713, %v712
        %v738 = vpack.c.b16 %v715, %v714
        %v739 = vpack.c.b16 %v717, %v716
        %v740 = vpack.c.b16 %v719, %v718
        %v741 = vpack.c.b16 %v721, %v720
        %v742 = vpack.c.b16 %v723, %v722
        %v743 = vpack.c.b16 %v725, %v724
        %v744 = vpack.c.b16 %v727, %v726
        %v745 = vpack.c.b16 %v729, %v728
        %762 = vst [vmem:[%s234] sm:$0xff] %v730
        %763 = vst [vmem:[%s234 + $0x8] sm:$0xff] %v731
        %764 = vst [vmem:[%s234 + $0x10] sm:$0xff] %v732
        %765 = vst [vmem:[%s234 + $0x18] sm:$0xff] %v733
        %766 = vst [vmem:[%s234 + $0x20] sm:$0xff] %v734
        %767 = vst [vmem:[%s234 + $0x28] sm:$0xff] %v735
        %768 = vst [vmem:[%s234 + $0x30] sm:$0xff] %v736
        %769 = vst [vmem:[%s234 + $0x38] sm:$0xff] %v737
        %770 = vst [vmem:[%s234 + $0x40] sm:$0xff] %v738
        %771 = vst [vmem:[%s234 + $0x48] sm:$0xff] %v739
        %772 = vst [vmem:[%s234 + $0x50] sm:$0xff] %v740
        %773 = vst [vmem:[%s234 + $0x58] sm:$0xff] %v741
        %774 = vst [vmem:[%s234 + $0x60] sm:$0xff] %v742
        %775 = vst [vmem:[%s234 + $0x68] sm:$0xff] %v743
        %776 = vst [vmem:[%s234 + $0x70] sm:$0xff] %v744
        %777 = vst [vmem:[%s234 + $0x78] sm:$0xff] %v745
        %v778 = vld [vmem:[%s2] sm:$0xf]
        %v779 = vld [vmem:[%s2 + $0x4] sm:$0xf]
        %v780 = vld [vmem:[%s2 + $0x8] sm:$0xf]
        %v781 = vld [vmem:[%s2 + $0xc] sm:$0xf]
        %v782 = vld [vmem:[%s2 + $0x10] sm:$0xf]
        %v783 = vld [vmem:[%s2 + $0x14] sm:$0xf]
        %v784 = vld [vmem:[%s2 + $0x18] sm:$0xf]
        %v785 = vld [vmem:[%s2 + $0x1c] sm:$0xf]
        %v786 = vld [vmem:[%s2 + $0x20] sm:$0xf]
        %v787 = vld [vmem:[%s2 + $0x24] sm:$0xf]
        %v798 = vunpack.c.l.b16 %v778
        %v799 = vunpack.c.l.b16 %v779
        %v800 = vunpack.c.l.b16 %v780
        %v801 = vunpack.c.l.b16 %v781
        %v802 = vunpack.c.l.b16 %v782
        %v803 = vunpack.c.l.b16 %v783
        %v804 = vunpack.c.l.b16 %v784
        %v805 = vunpack.c.l.b16 %v785
        %v806 = vunpack.c.l.b16 %v786
        %v807 = vunpack.c.l.b16 %v787
        %v808 = vpack.c.b16 %v799, %v798
        %v809 = vpack.c.b16 %v801, %v800
        %v810 = vpack.c.b16 %v803, %v802
        %v811 = vpack.c.b16 %v805, %v804
        %v812 = vpack.c.b16 %v807, %v806
        %818 = vmatprep.subr.bf16.mxu0 0
        %819 = vmatpush1.bf16.msra.mxu0 %v808
        %820 = vmatprep.subr.bf16.mxu0 0
        %821 = vmatpush1.bf16.msra.mxu0 %v809
        %822 = vmatprep.subr.bf16.mxu0 0
        %823 = vmatpush1.bf16.msra.mxu0 %v810
        %824 = vmatprep.subr.bf16.mxu0 0
        %825 = vmatpush1.bf16.msra.mxu0 %v811
        %826 = vmatprep.subr.bf16.mxu0 0
        %827 = vmatpush1.bf16.msra.mxu0 %v812
        %828 = vmatprep.subr.bf16.mxu0 0
        %829 = vmatpush1.bf16.msra.mxu0 0
        %830 = vmatprep.subr.bf16.mxu0 0
        %831 = vmatpush1.bf16.msra.mxu0 0
        %832 = vmatprep.subr.bf16.mxu0 0
        %833 = vmatpush1.bf16.msra.mxu0 0
        %834 = vmatprep.subr.bf16.mxu0 0
        %835 = vmatpush1.bf16.msra.mxu0 0
        %836 = vmatprep.subr.bf16.mxu0 0
        %837 = vmatpush1.bf16.msra.mxu0 0
        %838 = vmatprep.subr.bf16.mxu0 0
        %839 = vmatpush1.bf16.msra.mxu0 0
        %840 = vmatprep.subr.bf16.mxu0 0
        %841 = vmatpush1.bf16.msra.mxu0 0
        %842 = vmatprep.subr.bf16.mxu0 0
        %843 = vmatpush1.bf16.msra.mxu0 0
        %844 = vmatprep.subr.bf16.mxu0 0
        %845 = vmatpush1.bf16.msra.mxu0 0
        %846 = vmatprep.subr.bf16.mxu0 0
        %847 = vmatpush1.bf16.msra.mxu0 0
        %848 = vmatprep.subr.bf16.mxu0 0
        %849 = vmatpush1.bf16.msra.mxu0 0
        %850 = vmatprep.mubr.bf16.mxu0 0
        %851 = vmatmul.mubr.bf16.gmra.mrb[0].mxu0 %v428
        %v852 = vpop.f32.mrb[0].mxu0
        %v853 = vadd.f32 0.0, %v852
        %v854 = vpop.f32.mrb[0].mxu0
        %v855 = vpop.f32.mrb[0].mxu0
        %v856 = vadd.f32 0.0, %v855
        %v857 = vpop.f32.mrb[0].mxu0
        %858 = vmatprep.mubr.bf16.mxu0 0
        %859 = vmatmul.mubr.bf16.gmra.mrb[0].mxu0 %v431
        %v860 = vpop.f32.mrb[0].mxu0
        %v861 = vadd.f32 0.0, %v860
        %v862 = vpop.f32.mrb[0].mxu0
        %v863 = vpop.f32.mrb[0].mxu0
        %v864 = vadd.f32 0.0, %v863
        %v865 = vpop.f32.mrb[0].mxu0
        %866 = vmatprep.mubr.bf16.mxu0 0
        %867 = vmatmul.mubr.bf16.gmra.mrb[0].mxu0 %v434
        %v868 = vpop.f32.mrb[0].mxu0
        %v869 = vadd.f32 0.0, %v868
        %v870 = vpop.f32.mrb[0].mxu0
        %v871 = vpop.f32.mrb[0].mxu0
        %v872 = vadd.f32 0.0, %v871
        %v873 = vpop.f32.mrb[0].mxu0
        %874 = vmatprep.mubr.bf16.mxu0 0
        %875 = vmatmul.mubr.bf16.gmra.mrb[0].mxu0 %v437
        %v876 = vpop.f32.mrb[0].mxu0
        %v877 = vadd.f32 0.0, %v876
        %v878 = vpop.f32.mrb[0].mxu0
        %v879 = vpop.f32.mrb[0].mxu0
        %v880 = vadd.f32 0.0, %v879
        %v881 = vpop.f32.mrb[0].mxu0
        %882 = vdwg.mxu0
        %vm883 = vcmask 7168
        %884 = vst.msk [vmem:[%s253] sm:$0xff] %vm883, %v853
        %885 = vst.msk [vmem:[%s253 + $0x8] sm:$0xff] %vm883, %v856
        %886 = vst.msk [vmem:[%s253 + $0x10] sm:$0xff] %vm883, %v861
        %887 = vst.msk [vmem:[%s253 + $0x18] sm:$0xff] %vm883, %v864
        %888 = vst.msk [vmem:[%s253 + $0x20] sm:$0xff] %vm883, %v869
        %889 = vst.msk [vmem:[%s253 + $0x28] sm:$0xff] %vm883, %v872
        %890 = vst.msk [vmem:[%s253 + $0x30] sm:$0xff] %vm883, %v877
        %891 = vst.msk [vmem:[%s253 + $0x38] sm:$0xff] %vm883, %v880
        %s892 = sand.u32 %s118, 1
        %s893 = scalar_lea.sflag [#allocation4], %s892
        %s894 = sand.u32 %s118, 1
        %s895 = smul.addr %s894, 128
        %s896 = scalar_lea.vmem [#allocation5], %s895
        %s897 = smul.u32 8, %s21
        %p898 = scmp.lt.s32.totalorder %s897, 15
        %s899 = scalar_select %p898, %s897, 15
        %s900 = smul.addr %s899, 8
        %s901 = scalar_lea.vmem %s5, %s900
        // Predicated region
        $region41: #{tpu_custom_call.1} parent=35 // pred_check
          %p902 = pneg %p128
        $region42: #{tpu_custom_call.1} parent=35 // pred_check_branch
          %904 = sbr.rel (%p902) target = $region44
        $region43: #{tpu_custom_call.1} parent=35 // pred_region
          %s905 = smul.u32 8, %s21
          %s907 = ssub.s32 2048, 2048
          %908 = vsyncadd %s893, %s907
          %s909 = smul.addr %s905, 4
          %s910 = smul.addr %s909, 64
          %s911 = scalar_lea.hbm %s4, %s910
          %s912 = sshll.u32 %s896, 4
          %s913 = int_to_ptr.vmem [resolvable:$true] %s912
          %918 = dma.vmem_to_hbm [thread:$0]  %s913, 2048, %s911, %s893, 256, 256, 16
        $region44: #{tpu_custom_call.1} parent=35 // pred_fallthru
          _
        // Predicated region
        $region45: #{tpu_custom_call.1} parent=35 // pred_check
          %p919 = pneg %p154
        $region46: #{tpu_custom_call.1} parent=35 // pred_check_branch
          %921 = sbr.rel (%p919) target = $region48
        $region47: #{tpu_custom_call.1} parent=35 // pred_region
          %s922 = smul.u32 8, %s21
        $region48: #{tpu_custom_call.1} parent=35 // pred_fallthru
          _
      $region36: #{tpu_custom_call.1} parent=5 // pred_fallthru
        _
      %p923 = scmp.le.s32.totalorder 2, %s16
      // Predicated region
      $region49: #{tpu_custom_call.1} parent=5 // pred_check
        %p924 = pneg %p923
      $region50: #{tpu_custom_call.1} parent=5 // pred_check_branch
        %926 = sbr.rel (%p924) target = $region52
      $region51: #{tpu_custom_call.1} parent=5 // pred_region
        %s927 = ssub.s32 %s16, 2
        // Predicated region
        $region53: #{tpu_custom_call.1} parent=51 // pred_check
          %p928 = pneg %p134
        $region54: #{tpu_custom_call.1} parent=51 // pred_check_branch
          %930 = sbr.rel (%p928) target = $region56
        $region55: #{tpu_custom_call.1} parent=51 // pred_region
          %s931 = sand.u32 %s119, 1
          %s932 = scalar_lea.sflag [#allocation4], %s931
          %s933 = sand.u32 %s119, 1
          %s934 = smul.addr %s933, 128
          %s935 = scalar_lea.vmem [#allocation5], %s934
          %936 = dma.done %s932, 2048
        $region56: #{tpu_custom_call.1} parent=51 // pred_fallthru
          _
        // Predicated region
        $region57: #{tpu_custom_call.1} parent=51 // pred_check
          %p937 = pneg %p160
        $region58: #{tpu_custom_call.1} parent=51 // pred_check_branch
          %939 = sbr.rel (%p937) target = $region60
        $region59: #{tpu_custom_call.1} parent=51 // pred_region
          %s940 = smul.u32 8, %s22
          %p941 = scmp.lt.s32.totalorder %s940, 15
          %s942 = scalar_select %p941, %s940, 15
          %s943 = smul.addr %s942, 8
          %s944 = scalar_lea.vmem %s5, %s943
        $region60: #{tpu_custom_call.1} parent=51 // pred_fallthru
          _
      $region52: #{tpu_custom_call.1} parent=5 // pred_fallthru
        _
    $region6: #{tpu_custom_call.1} parent=1 // loop_footer
      %s20 = sadd.s32 1, %s16
    $region7: #{tpu_custom_call.1} parent=1 // loop_footer_branch
      %15 = sbr.rel target = $region3
    $region8: #{tpu_custom_call.1} parent=1 // loop_exit
      _
    %945 = vsyncpa [#allocation3], 1
    %s946 = scalar_lea.sflag [#allocation3], 1
    %947 = vsyncpa %s946, 1
    %948 = vsyncpa [#allocation4], 1
    %s949 = scalar_lea.sflag [#allocation4], 1
    %950 = vsyncpa %s949, 1

</llo_original>
